<compile_context>
chip_gen: v7x
topology: tpu7x:2x2x1
jax: 0.10.0
libtpu: 0.0.40
codegen_flags: <defaults>
</compile_context>

<pallas_src>
import functools
import math

import jax
import jax.numpy as jnp
from jax.experimental import pallas as pl
from jax.experimental.pallas import tpu as pltpu


# ----------------------------------------------------------------------------
# Fused MemBlock kernel
# ----------------------------------------------------------------------------
def _memblock_kernel(mask_ref, x_ref, wrb_ref, wf_ref, o_ref, *,
                     width, roll_like_np):
    C, Mb = x_ref.shape
    x0 = x_ref[...]                                          # (C, Mb) f32

    # Hoisted sublane-broadcast bf16 border masks (one per non-center tap):
    # computed ONCE per grid step, reused by all 13 convs.
    masks = [None] * 9
    for dd in range(9):
        if dd != 4:
            masks[dd] = jnp.broadcast_to(mask_ref[dd:dd + 1, :], (C, Mb))

    # Constant "bias block" (row 0 = 1, rest = 0) appended to every patch
    # block so each conv's bias rides through the MXU f32 accumulation as one
    # extra K column of its bf16 weight matrix.
    bias_blk = (jax.lax.broadcasted_iota(jnp.int32, (C, Mb), 0) == 0
                ).astype(jnp.bfloat16)

    def shifted(a, s):
        # b[:, m] = a[:, (m + s) mod Mb]; wrapped / out-of-image entries are
        # zeroed by the per-image border masks.
        if s == 0:
            return a
        amt = (-s) % Mb if roll_like_np else s % Mb
        return pltpu.roll(a, amt, axis=1)

    def build_patches(a_f32):
        # (C, Mb) f32 -> (10*C, Mb) bf16: 9 masked taps + bias block.  Cast to
        # bf16 once, BEFORE the rolls / mask multiplies / concat.
        a = a_f32.astype(jnp.bfloat16)
        cols = []
        dd = 0
        for dh in (-1, 0, 1):
            for dw in (-1, 0, 1):
                t = shifted(a, dh * width + dw)
                if dd != 4:
                    t = t * masks[dd]
                cols.append(t)
                dd += 1
        cols.append(bias_blk)
        return jnp.concatenate(cols, axis=0)

    def mm(w, patches):                                      # bf16 x bf16 -> f32
        return jnp.dot(w, patches, preferred_element_type=jnp.float32)

    # 6 ResBlocks (conv->BN->ReLU->conv->BN, *res_scale, +skip) with the fuse
    # conv folded in as a running K-split accumulation that reuses the patch
    # block already built for the next ResBlock's first conv: 13 patch builds
    # instead of 18.  BN affine, res_scale and biases are pre-folded into the
    # bf16 weight matrices on the host.
    h = x0                                                   # f32 residual chain
    acc = x0                                                 # f32 fuse accumulator
    p = build_patches(h)                                     # patches of x
    for l in range(6):
        t = jnp.maximum(mm(wrb_ref[2 * l], p), 0.0)          # conv1+BN+ReLU
        h = mm(wrb_ref[2 * l + 1], build_patches(t)) + h     # conv2+BN, +skip
        p = build_patches(h)                                 # patches of c_{l+1}
        acc = acc + mm(wf_ref[l], p)                         # fuse partial; p is
        #                                  also next ResBlock's conv1 patches.
    o_ref[...] = acc.astype(o_ref.dtype)


# ----------------------------------------------------------------------------
# Host-side prep: masks, folded bf16 weights, wrapper
# ----------------------------------------------------------------------------
def _make_masks(H, W):
    m = jnp.arange(H * W)
    h, w = m // W, m % W
    rows = []
    for dh in (-1, 0, 1):
        for dw in (-1, 0, 1):
            ok = (h + dh >= 0) & (h + dh < H) & (w + dw >= 0) & (w + dw < W)
            rows.append(ok.astype(jnp.float32))
    return jnp.stack(rows)                                   # (9, H*W)


def _wmat_with_bias(w, b):
    # torch conv weight (Cout, Cin, 3, 3) + bias (Cout,) -> (Cout, 10*Cin):
    # columns [0, 9*Cin) in K order (kh, kw, ci); column 9*Cin holds the bias
    # (pairs with the ones-row of the in-kernel bias block); rest are zero.
    co, ci = w.shape[0], w.shape[1]
    wm = jnp.transpose(w, (0, 2, 3, 1)).reshape(co, 9 * ci)
    bias_cols = jnp.concatenate(
        [b[:, None], jnp.zeros((co, ci - 1), w.dtype)], axis=1)
    return jnp.concatenate([wm, bias_cols], axis=1)


def _prep_params(params, res_scale, C):
    """Fold eval-mode BN affine, res_scale and biases into bf16 weight mats."""
    wrb = []
    for rb in params["resblocks"]:
        w1 = rb["w1"] * rb["s1"][:, None, None, None]
        b1 = rb["b1"] * rb["s1"] + rb["t1"]
        w2 = rb["w2"] * rb["s2"][:, None, None, None] * res_scale
        b2 = (rb["b2"] * rb["s2"] + rb["t2"]) * res_scale
        wrb += [_wmat_with_bias(w1, b1), _wmat_with_bias(w2, b2)]
    wrb = jnp.stack(wrb).astype(jnp.bfloat16)                # (12, C, 10C)

    # Fuse conv split per source block for the K-split accumulation; the fuse
    # bias rides on block 0's weight only.
    wf_full = (params["wf"] * res_scale).reshape(C, 6, C, 3, 3)
    bf = params["bf"] * res_scale
    wfs = []
    for l in range(6):
        bl = bf if l == 0 else jnp.zeros_like(bf)
        wfs.append(_wmat_with_bias(wf_full[:, l], bl))
    wf = jnp.stack(wfs).astype(jnp.bfloat16)                 # (6, C, 10C)
    return wrb, wf


@functools.lru_cache(maxsize=None)
def _roll_matches_numpy():
    """True iff pltpu.roll follows jnp.roll's convention (out[m] = in[m-k]).

    Probed once on the real backend; an unexpected result raises instead of
    silently choosing a direction (which would be structurally wrong convs).
    """
    def k(x_ref, o_ref):
        o_ref[...] = pltpu.roll(x_ref[...], 1, axis=1)

    x = jnp.tile(jnp.arange(128, dtype=jnp.float32)[None, :], (8, 1))
    y = pl.pallas_call(
        k, out_shape=jax.ShapeDtypeStruct((8, 128), jnp.float32))(x)
    first = float(y[0, 0])
    if first == 127.0:
        return True
    if first == 1.0:
        return False
    raise RuntimeError(f"unexpected pltpu.roll probe value: {first}")


def _default_images_per_step(N, M, lane_budget=2048):
    # Grow the lane axis (amortizes per-grid-step overhead, reuses weights and
    # masks, raises MXU N occupancy) while keeping >= 2 grid steps whenever
    # N >= 2 so v7x's two TensorCores both get work and pipelining exists.
    best = 1
    for nb in range(1, N + 1):
        if N % nb or nb * M > lane_budget:
            continue
        if N // nb >= 2 or N == 1:
            best = nb
    return best


def memblock_fwd(x_nchw, params, res_scale=1.0, *, images_per_step=None):
    N, C, H, W = x_nchw.shape
    M = H * W
    assert C % 8 == 0 and M % 128 == 0, (C, M)
    nb = images_per_step or _default_images_per_step(N, M)
    assert N % nb == 0, (N, nb)
    Mb = nb * M

    # Lane-dense layout: channels on sublanes, (image, pixel) on lanes.  Each
    # grid step processes `nb` images side by side along the lane axis; the
    # per-image border masks (tiled below) zero every cross-image roll tap.
    x_flat = jnp.transpose(x_nchw.astype(jnp.float32).reshape(N, C, M),
                           (1, 0, 2)).reshape(C, N * M)
    masks = jnp.tile(_make_masks(H, W), (1, nb)).astype(jnp.bfloat16)
    wrb, wf = _prep_params(params, res_scale, C)

    kernel = functools.partial(_memblock_kernel, width=W,
                               roll_like_np=_roll_matches_numpy())

    out = pl.pallas_call(
        kernel,
        out_shape=jax.ShapeDtypeStruct((C, N * M), jnp.float32),
        grid_spec=pltpu.PrefetchScalarGridSpec(
            num_scalar_prefetch=0,
            grid=(N // nb,),
            in_specs=[
                pl.BlockSpec((9, Mb), lambda g: (0, 0)),             # masks
                pl.BlockSpec((C, Mb), lambda g: (0, g)),             # x slab
                pl.BlockSpec((12, C, 10 * C), lambda g: (0, 0, 0)),  # rb weights
                pl.BlockSpec((6, C, 10 * C), lambda g: (0, 0, 0)),   # fuse weights
            ],
            out_specs=pl.BlockSpec((C, Mb), lambda g: (0, g)),
        ),
        compiler_params=pltpu.CompilerParams(
            dimension_semantics=("parallel",)),
    )(masks, x_flat, wrb, wf)
    return out.reshape(C, N, M).transpose(1, 0, 2).reshape(N, C, H, W)


# ----------------------------------------------------------------------------
# Pure-JAX reference (lax.conv, f32 HIGHEST) for verification
# ----------------------------------------------------------------------------
def _conv_ref(x, w, b):
    y = jax.lax.conv_general_dilated(
        x, w, (1, 1), "SAME",
        dimension_numbers=("NCHW", "OIHW", "NCHW"),
        precision=jax.lax.Precision.HIGHEST)
    return y + b.reshape(1, -1, 1, 1)


def _bn_ref(x, scale, shift):
    return x * scale.reshape(1, -1, 1, 1) + shift.reshape(1, -1, 1, 1)


def _resblock_ref(x, p, res_scale):
    h = jnp.maximum(_bn_ref(_conv_ref(x, p["w1"], p["b1"]), p["s1"], p["t1"]), 0.0)
    h = _bn_ref(_conv_ref(h, p["w2"], p["b2"]), p["s2"], p["t2"])
    return h * res_scale + x


def memblock_ref(x, params, res_scale=1.0):
    cs = []
    h = x
    for rb in params["resblocks"]:
        h = _resblock_ref(h, rb, res_scale)
        cs.append(h)
    cat = jnp.concatenate(cs, axis=1)
    return _conv_ref(cat, params["wf"], params["bf"]) * res_scale + x


# ----------------------------------------------------------------------------
# Deterministic parameter init (shapes per MemBlock.__init__, kernel_size=3)
# ----------------------------------------------------------------------------
def init_params(key, n_feat):
    eps = 1e-5

    def conv_init(k, cout, cin):
        k1, k2 = jax.random.split(k)
        w = jax.random.normal(k1, (cout, cin, 3, 3), jnp.float32) / math.sqrt(cin * 9)
        b = 0.01 * jax.random.normal(k2, (cout,), jnp.float32)
        return w, b

    def bn_init(k, c):
        k1, k2, k3, k4 = jax.random.split(k, 4)
        gamma = 1.0 + 0.1 * jax.random.normal(k1, (c,), jnp.float32)
        beta = 0.1 * jax.random.normal(k2, (c,), jnp.float32)
        mean = 0.1 * jax.random.normal(k3, (c,), jnp.float32)
        var = 1.0 + 0.1 * jnp.abs(jax.random.normal(k4, (c,), jnp.float32))
        scale = gamma / jnp.sqrt(var + eps)
        shift = beta - mean * scale
        return scale, shift

    keys = jax.random.split(key, 6 * 4 + 1)
    resblocks = []
    for i in range(6):
        kc1, kb1, kc2, kb2 = keys[4 * i:4 * i + 4]
        w1, b1 = conv_init(kc1, n_feat, n_feat)
        s1, t1 = bn_init(kb1, n_feat)
        w2, b2 = conv_init(kc2, n_feat, n_feat)
        s2, t2 = bn_init(kb2, n_feat)
        resblocks.append(dict(w1=w1, b1=b1, s1=s1, t1=t1,
                              w2=w2, b2=b2, s2=s2, t2=t2))
    wf, bf = conv_init(keys[-1], n_feat, 6 * n_feat)
    return dict(resblocks=resblocks, wf=wf, bf=bf)


# ----------------------------------------------------------------------------
if __name__ == "__main__":
    key = jax.random.PRNGKey(0)
    k_x, k_p = jax.random.split(key)

    N, C, H, W = 2, 8, 16, 16          # n_feat = 8, kernel_size = 3
    res_scale = 1.0

    x = jax.random.normal(k_x, (N, C, H, W), jnp.float32)   # PyTorch NCHW layout
    params = init_params(k_p, C)

    ref = jax.block_until_ready(memblock_ref(x, params, res_scale))

    # images_per_step=1 is the default grid=(N,) path; images_per_step=2 locks
    # in the lane-axis image-batching invariant (masked rolls across images).
    for nb in (1, 2):
        out = jax.block_until_ready(
            memblock_fwd(x, params, res_scale, images_per_step=nb))
        assert out.shape == (N, C, H, W)
        # bf16 MXU operands vs f32 HIGHEST reference -> relaxed tolerance;
        # structural bugs would produce O(1) relative error.
        rel = float(jnp.linalg.norm(out - ref) / jnp.linalg.norm(ref))
        mad = float(jnp.max(jnp.abs(out - ref)))
        assert rel < 4e-2 and mad < 0.25, (nb, rel, mad)

    print("KERNEL_OK")
</pallas_src>

<mosaic_0001>
module attributes {stable_mosaic.version = 11 : i64} {
  func.func @k(%arg0: memref<8x128xf32, #tpu.memory_space<vmem>>, %arg1: memref<8x128xf32, #tpu.memory_space<vmem>>) attributes {dimension_semantics = [], scalar_prefetch = 0 : i64, scratch_operands = 0 : i64, tpu.core_type = #tpu.core_type<tc>} {
    %c0 = arith.constant 0 : index
    %c0_0 = arith.constant 0 : index
    %0 = vector.load %arg0[%c0, %c0_0] : memref<8x128xf32, #tpu.memory_space<vmem>>, vector<8x128xf32>
    %c1_i32 = arith.constant 1 : i32
    %1 = tpu.dynamic_rotate %0 by %c1_i32 dim 1 : vector<8x128xf32>, i32 -> vector<8x128xf32>
    %c0_1 = arith.constant 0 : index
    %c0_2 = arith.constant 0 : index
    %2 = vector.load %arg1[%c0_1, %c0_2] : memref<8x128xf32, #tpu.memory_space<vmem>>, vector<8x128xf32>
    tpu.vector_store %arg1[%c0_1, %c0_2], %1 {strides = array<i32>} : memref<8x128xf32, #tpu.memory_space<vmem>>, vector<8x128xf32>,
    return
  }
}

</mosaic_0001>

<llo_original>
// kernel: tpu_custom_call.1
$region0: #{tpu_custom_call.1}
  #allocation0 [shape = 'u32[]', space=smem, size = 0x4, offset = 0x4, fixed_abs, tag = 'smem constant byte address 0x4 - core index']
  #allocation1 [shape = 'u32[144,128]{1,0:T(1,128)}', space=vmem, size = 0x12000, scoped, tag = 'internal scratch']
  %s0 = inlined_call_operand.hbm [shape: f32[8,128], index: 0, kind: input, shape index: {}]
  %s1 = inlined_call_operand.hbm [shape: f32[8,128], index: 1, kind: output, shape index: {}]
  %s2 = sld [smem:[#allocation0]]
  $region18: #{tpu_custom_call.1} parent=0
    _
  %s4 = ssub.s32 1, %s2
  %s5 = scalar_select 0, %s4, %s2
  $region1: #{tpu_custom_call.1} parent=0
    #allocation2 [shape = 'u8[4096]{0}', space=vmem, size = 0x1000, scoped, tag = 'input window, operand 0, single buffered']
    #allocation3 [shape = 's32[1]{0}', space=sflag, size = 0x4, scoped, tag = 'scoped memory for tpu_custom_call.1']
    #allocation4 [shape = 's32[1]{0}', space=sflag, size = 0x4, scoped, tag = 'scoped memory for tpu_custom_call.1']
    #allocation5 [shape = 'u8[4096]{0}', space=vmem, size = 0x1000, scoped, tag = 'output window, operand 0, single buffered']
    %6 = vsyncpa [#allocation3], 0
    %7 = vsyncpa [#allocation4], 0
    // Predicated region
    $region2: #{tpu_custom_call.1} parent=1 // pred_check
      _
    $region3: #{tpu_custom_call.1} parent=1 // pred_check_branch
      %9 = sbr.rel (0) target = $region5
    $region4: #{tpu_custom_call.1} parent=1 // pred_region
      %s11 = ssub.s32 128, 128
      %12 = vsyncadd [#allocation3], %s11
      %s14 = sshll.u32 [#allocation2], 4
      %s15 = int_to_ptr.vmem [resolvable:$true] %s14
      %17 = dma.hbm_to_vmem [thread:$0]  %s0, 128, %s15, [#allocation3]
    $region5: #{tpu_custom_call.1} parent=1 // pred_fallthru
      _
    // Predicated region
    $region6: #{tpu_custom_call.1} parent=1 // pred_check
      _
    $region7: #{tpu_custom_call.1} parent=1 // pred_check_branch
      %19 = sbr.rel (0) target = $region9
    $region8: #{tpu_custom_call.1} parent=1 // pred_region
      %20 = dma.done [#allocation3], 128
    $region9: #{tpu_custom_call.1} parent=1 // pred_fallthru
      _
    %v21 = vld [vmem:[#allocation2] sm:$0xff]
    %22 = vrot.lane.b32.xlu0 %v21, 1
    %v23 = vpop.permute.xlu0 %22
    %24 = vst [vmem:[#allocation5] sm:$0xff] %v23
    // Predicated region
    $region10: #{tpu_custom_call.1} parent=1 // pred_check
      _
    $region11: #{tpu_custom_call.1} parent=1 // pred_check_branch
      %26 = sbr.rel (0) target = $region13
    $region12: #{tpu_custom_call.1} parent=1 // pred_region
      %s28 = ssub.s32 128, 128
      %29 = vsyncadd [#allocation4], %s28
      %s31 = sshll.u32 [#allocation5], 4
      %s32 = int_to_ptr.vmem [resolvable:$true] %s31
      %34 = dma.vmem_to_hbm [thread:$0]  %s32, 128, %s1, [#allocation4]
    $region13: #{tpu_custom_call.1} parent=1 // pred_fallthru
      _
    // Predicated region
    $region14: #{tpu_custom_call.1} parent=1 // pred_check
      _
    $region15: #{tpu_custom_call.1} parent=1 // pred_check_branch
      %36 = sbr.rel (0) target = $region17
    $region16: #{tpu_custom_call.1} parent=1 // pred_region
      %37 = dma.done [#allocation4], 128
    $region17: #{tpu_custom_call.1} parent=1 // pred_fallthru
      _
    %38 = vsyncpa [#allocation3], 1
    %39 = vsyncpa [#allocation4], 1

</llo_original>
